<compile_context>
chip_gen: v7x
topology: tpu7x:2x2x1
jax: 0.10.0
libtpu: 0.0.40
codegen_flags: <defaults>
</compile_context>

<pallas_src>
import functools

import jax
import jax.numpy as jnp
from jax.experimental import pallas as pl
from jax.experimental.pallas import tpu as pltpu


def _round_up(x, m):
    return ((x + m - 1) // m) * m


# ----------------------------------------------------------------------------
# Pallas kernel: per-edge-tile r-weighted multiply + feature reduction.
# ----------------------------------------------------------------------------
def _lp_score_kernel(r_ref, hu_ref, hv_ref, out_ref):
    # hu_ref / hv_ref : (D, TILE_E) gathered endpoint embeddings for this tile
    # r_ref           : (D, 1)      relation weights, lane-broadcast
    # out_ref         : (1, 1, TILE_E) lane-dense score row
    hu = hu_ref[...].astype(jnp.float32)
    hv = hv_ref[...].astype(jnp.float32)
    r = r_ref[...].astype(jnp.float32)
    prod = hu * r * hv                                 # full-vreg VPU multiply
    scores = jnp.sum(prod, axis=0, keepdims=True)      # sublane (feature) reduce
    out_ref[...] = scores.reshape(out_ref.shape)       # unmasked 128-lane store


def _link_scores_combined(h_u, h_v, r, u_idx, v_idx, *, tile_e=512):
    """Scores one combined edge list; returns f32[E_total]."""
    e_total = u_idx.shape[0]
    d = h_u.shape[1]

    tile_e = min(tile_e, _round_up(max(e_total, 1), 128))
    e_pad = _round_up(max(e_total, 1), tile_e)
    num_tiles = e_pad // tile_e

    pad = e_pad - e_total
    u_idx = jnp.pad(u_idx.astype(jnp.int32), (0, pad))   # pad rows -> index 0 (valid)
    v_idx = jnp.pad(v_idx.astype(jnp.int32), (0, pad))

    # Pre-gather endpoint rows (XLA gather in HBM) and transpose to the
    # lane-dense (D, E_pad) layout the kernel wants.  mode="clip" guarantees
    # no OOB reads even for malformed edge lists.
    hu_t = jnp.take(h_u, u_idx, axis=0, mode="clip").T    # (D, E_pad), native dtype
    hv_t = jnp.take(h_v, v_idx, axis=0, mode="clip").T    # (D, E_pad), native dtype
    r2 = r.reshape(d, 1)

    out = pl.pallas_call(
        _lp_score_kernel,
        out_shape=jax.ShapeDtypeStruct((num_tiles, 1, tile_e), jnp.float32),
        grid=(num_tiles,),
        in_specs=[
            pl.BlockSpec((d, 1), lambda i: (0, 0)),         # r
            pl.BlockSpec((d, tile_e), lambda i: (0, i)),    # gathered h_u tile
            pl.BlockSpec((d, tile_e), lambda i: (0, i)),    # gathered h_v tile
        ],
        out_specs=pl.BlockSpec((1, 1, tile_e), lambda i: (i, 0, 0)),
        compiler_params=pltpu.CompilerParams(
            dimension_semantics=("parallel",)),
    )(r2, hu_t, hv_t)

    return out.reshape(e_pad)[:e_total]


# ----------------------------------------------------------------------------
# Module-level forward (glue in plain JAX).
# ----------------------------------------------------------------------------
def emb_model_identity(g, x_dict):
    # TODO(synk): `emb_model` is an externally-injected GNN in the PyTorch
    # module; it is treated as identity on the input feature dict here.
    del g
    return x_dict


@functools.partial(jax.jit, static_argnames=("target_ntype_u", "target_ntype_v"))
def link_prediction_fullbatch_forward(positive_edges, negative_edges, g, x_dict,
                                      r, target_ntype_u, target_ntype_v):
    h_dict = emb_model_identity(g, x_dict)
    h_u = h_dict[target_ntype_u]
    h_v = h_dict[target_ntype_v]

    n_pos = positive_edges.shape[0]
    # Single kernel launch over the concatenated pos+neg edge list.
    u_idx = jnp.concatenate([positive_edges[:, 0], negative_edges[:, 0]])
    v_idx = jnp.concatenate([positive_edges[:, 1], negative_edges[:, 1]])
    scores = _link_scores_combined(h_u, h_v, r, u_idx, v_idx)
    pos_score = scores[:n_pos]
    neg_score = scores[n_pos:]
    return pos_score, neg_score


# ----------------------------------------------------------------------------
# Demo / correctness check.
# ----------------------------------------------------------------------------
if __name__ == "__main__":
    key = jax.random.PRNGKey(0)
    k1, k2, k3, k4 = jax.random.split(key, 4)

    emb_dim = 32
    n_u, n_v = 16, 12
    e_pos, e_neg = 8, 8

    x_u = jax.random.normal(k1, (n_u, emb_dim), dtype=jnp.float32)
    x_v = jax.random.normal(k2, (n_v, emb_dim), dtype=jnp.float32)
    x_dict = {"user": x_u, "item": x_v}

    positive_edges = jnp.stack(
        [jax.random.randint(k3, (e_pos,), 0, n_u),
         jax.random.randint(k4, (e_pos,), 0, n_v)], axis=1).astype(jnp.int32)
    negative_edges = jnp.stack(
        [jax.random.randint(k4, (e_neg,), 0, n_u),
         jax.random.randint(k3, (e_neg,), 0, n_v)], axis=1).astype(jnp.int32)

    # Parameter r, initialized to ones (matches nn.init.ones_).
    r = jnp.ones((emb_dim,), dtype=jnp.float32)

    g = None  # graph structure is unused by the identity emb_model

    pos_score, neg_score = link_prediction_fullbatch_forward(
        positive_edges, negative_edges, g, x_dict, r,
        target_ntype_u="user", target_ntype_v="item")
    jax.block_until_ready((pos_score, neg_score))

    # Pure-JAX reference check.
    ref_pos = jnp.sum(x_u[positive_edges[:, 0]] * r * x_v[positive_edges[:, 1]], axis=-1)
    ref_neg = jnp.sum(x_u[negative_edges[:, 0]] * r * x_v[negative_edges[:, 1]], axis=-1)
    assert jnp.allclose(pos_score, ref_pos, atol=1e-5, rtol=1e-5)
    assert jnp.allclose(neg_score, ref_neg, atol=1e-5, rtol=1e-5)

    print("KERNEL_OK")
</pallas_src>

<mosaic_0001>
module attributes {stable_mosaic.version = 11 : i64} {
  func.func @_lp_score_kernel(%arg0: i32, %arg1: memref<32x1xf32, #tpu.memory_space<vmem>>, %arg2: memref<32x128xf32, #tpu.memory_space<vmem>>, %arg3: memref<32x128xf32, #tpu.memory_space<vmem>>, %arg4: memref<1x1x128xf32, #tpu.memory_space<vmem>>) attributes {dimension_semantics = [#tpu.dimension_semantics<parallel>], iteration_bounds = array<i64: 1>, scalar_prefetch = 0 : i64, scratch_operands = 0 : i64, tpu.core_type = #tpu.core_type<tc>, window_params = [{pipeline_mode = #tpu.pipeline_mode<synchronous>, transform_indices = @transform_0, window_bounds = array<i64: 32, 1>}, {transform_indices = @transform_1, window_bounds = array<i64: 32, 128>}, {transform_indices = @transform_2, window_bounds = array<i64: 32, 128>}, {transform_indices = @transform_3, window_bounds = array<i64: 1, 1, 128>}]} {
    %c0 = arith.constant 0 : index
    %c0_0 = arith.constant 0 : index
    %0 = vector.load %arg2[%c0, %c0_0] : memref<32x128xf32, #tpu.memory_space<vmem>>, vector<32x128xf32>
    %c0_1 = arith.constant 0 : index
    %c0_2 = arith.constant 0 : index
    %1 = vector.load %arg3[%c0_1, %c0_2] : memref<32x128xf32, #tpu.memory_space<vmem>>, vector<32x128xf32>
    %c0_3 = arith.constant 0 : index
    %c0_4 = arith.constant 0 : index
    %2 = vector.load %arg1[%c0_3, %c0_4] : memref<32x1xf32, #tpu.memory_space<vmem>>, vector<32x1xf32>
    %3 = vector.broadcast %2 : vector<32x1xf32> to vector<32x128xf32>
    %4 = arith.mulf %0, %3 : vector<32x128xf32>
    %5 = arith.mulf %4, %1 : vector<32x128xf32>
    %cst = arith.constant dense<0.000000e+00> : vector<128xf32>
    %6 = vector.multi_reduction <add>, %5, %cst [0] : vector<32x128xf32> to vector<128xf32>
    %7 = vector.shape_cast %6 : vector<128xf32> to vector<1x128xf32>
    %8 = vector.shape_cast %7 : vector<1x128xf32> to vector<1x1x128xf32>
    %c0_5 = arith.constant 0 : index
    %c0_6 = arith.constant 0 : index
    %c0_7 = arith.constant 0 : index
    %9 = vector.load %arg4[%c0_5, %c0_6, %c0_7] : memref<1x1x128xf32, #tpu.memory_space<vmem>>, vector<1x1x128xf32>
    tpu.vector_store %arg4[%c0_5, %c0_6, %c0_7], %8 {strides = array<i32>} : memref<1x1x128xf32, #tpu.memory_space<vmem>>, vector<1x1x128xf32>,
    return
  }
  func.func @transform_0(%arg0: i32) -> (i32, i32) {
    %c0_i32 = arith.constant 0 : i32
    %c0_i32_0 = arith.constant 0 : i32
    %c0_i32_1 = arith.constant 0 : i32
    return %c0_i32, %c0_i32_0 : i32, i32
  }
  func.func @transform_1(%arg0: i32) -> (i32, i32) {
    %c0_i32 = arith.constant 0 : i32
    %c0_i32_0 = arith.constant 0 : i32
    return %c0_i32, %arg0 : i32, i32
  }
  func.func @transform_2(%arg0: i32) -> (i32, i32) {
    %c0_i32 = arith.constant 0 : i32
    %c0_i32_0 = arith.constant 0 : i32
    return %c0_i32, %arg0 : i32, i32
  }
  func.func @transform_3(%arg0: i32) -> (i32, i32, i32) {
    %c0_i32 = arith.constant 0 : i32
    %c0_i32_0 = arith.constant 0 : i32
    %c0_i32_1 = arith.constant 0 : i32
    return %arg0, %c0_i32, %c0_i32_0 : i32, i32, i32
  }
}

</mosaic_0001>

<llo_original>
// kernel: link_prediction_fullbatch_forward.1
$region0: #{link_prediction_fullbatch_forward.1}
  #allocation0 [shape = 'u32[]', space=smem, size = 0x4, offset = 0x4, fixed_abs, tag = 'smem constant byte address 0x4 - core index']
  #allocation1 [shape = 'u32[144,128]{1,0:T(1,128)}', space=vmem, size = 0x12000, scoped, tag = 'internal scratch']
  %s0 = inlined_call_operand.vmem [shape: f32[32,1], index: 0, kind: input, shape index: {}]
  %s1 = inlined_call_operand.vmem [shape: f32[32,128], index: 1, kind: input, shape index: {}]
  %s2 = inlined_call_operand.vmem [shape: f32[32,128], index: 2, kind: input, shape index: {}]
  %s3 = inlined_call_operand.vmem [shape: f32[1,1,128], index: 3, kind: output, shape index: {}]
  %s4 = sld [smem:[#allocation0]]
  $region22: #{link_prediction_fullbatch_forward.1} parent=0
    _
  %s6 = ssub.s32 1, %s4
  %s7 = scalar_select 0, %s6, %s4
  // Predicated region
  $region2: #{link_prediction_fullbatch_forward.1} parent=0 // pred_check
    _
  $region3: #{link_prediction_fullbatch_forward.1} parent=0 // pred_check_branch
    %9 = sbr.rel (0) target = $region5
  $region4: #{link_prediction_fullbatch_forward.1} parent=0 // pred_region
    _
  $region5: #{link_prediction_fullbatch_forward.1} parent=0 // pred_fallthru
    _
  // Predicated region
  $region6: #{link_prediction_fullbatch_forward.1} parent=0 // pred_check
    _
  $region7: #{link_prediction_fullbatch_forward.1} parent=0 // pred_check_branch
    %11 = sbr.rel (0) target = $region9
  $region8: #{link_prediction_fullbatch_forward.1} parent=0 // pred_region
    _
  $region9: #{link_prediction_fullbatch_forward.1} parent=0 // pred_fallthru
    _
  // Predicated region
  $region10: #{link_prediction_fullbatch_forward.1} parent=0 // pred_check
    _
  $region11: #{link_prediction_fullbatch_forward.1} parent=0 // pred_check_branch
    %13 = sbr.rel (0) target = $region13
  $region12: #{link_prediction_fullbatch_forward.1} parent=0 // pred_region
    _
  $region13: #{link_prediction_fullbatch_forward.1} parent=0 // pred_fallthru
    _
  %v14 = vld [vmem:[%s1] sm:$0xff]
  %v15 = vld [vmem:[%s1 + $0x8] sm:$0xff]
  %v16 = vld [vmem:[%s1 + $0x10] sm:$0xff]
  %v17 = vld [vmem:[%s1 + $0x18] sm:$0xff]
  %v18 = vld [vmem:[%s2] sm:$0xff]
  %v19 = vld [vmem:[%s2 + $0x8] sm:$0xff]
  %v20 = vld [vmem:[%s2 + $0x10] sm:$0xff]
  %v21 = vld [vmem:[%s2 + $0x18] sm:$0xff]
  %v22 = vld [vmem:[%s0] sm:$0xff]
  %v23 = vld [vmem:[%s0 + $0x8] sm:$0xff]
  %v24 = vld [vmem:[%s0 + $0x10] sm:$0xff]
  %v25 = vld [vmem:[%s0 + $0x18] sm:$0xff]
  %27 = vset.pattern.permute.xlu0 0
  %28 = vperm.xlu0 %27, %v22
  %v29 = vpop.permute.xlu0 %28
  %32 = vset.pattern.permute.xlu0 0
  %33 = vperm.xlu0 %32, %v23
  %v34 = vpop.permute.xlu0 %33
  %37 = vset.pattern.permute.xlu0 0
  %38 = vperm.xlu0 %37, %v24
  %v39 = vpop.permute.xlu0 %38
  %42 = vset.pattern.permute.xlu0 0
  %43 = vperm.xlu0 %42, %v25
  %v44 = vpop.permute.xlu0 %43
  %v46 = vmul.f32 %v14, %v29
  %v47 = vmul.f32 %v15, %v34
  %v48 = vmul.f32 %v16, %v39
  %v49 = vmul.f32 %v17, %v44
  %v50 = vmul.f32 %v46, %v18
  %v51 = vmul.f32 %v47, %v19
  %v52 = vmul.f32 %v48, %v20
  %v53 = vmul.f32 %v49, %v21
  %v54 = vadd.f32 %v50, %v51
  %v55 = vadd.f32 %v54, %v52
  %v56 = vadd.f32 %v55, %v53
  %v57 = vrot.slane %v56, 4
  %v58 = vadd.f32 %v56, %v57
  %v59 = vrot.slane %v58, 2
  %v60 = vadd.f32 %v58, %v59
  %v61 = vrot.slane %v60, 1
  %v62 = vadd.f32 %v60, %v61
  %63 = vst [vmem:[%s3] sm:$0x1] %v62
  // Predicated region
  $region14: #{link_prediction_fullbatch_forward.1} parent=0 // pred_check
    _
  $region15: #{link_prediction_fullbatch_forward.1} parent=0 // pred_check_branch
    %65 = sbr.rel (0) target = $region17
  $region16: #{link_prediction_fullbatch_forward.1} parent=0 // pred_region
    _
  $region17: #{link_prediction_fullbatch_forward.1} parent=0 // pred_fallthru
    _
  // Predicated region
  $region18: #{link_prediction_fullbatch_forward.1} parent=0 // pred_check
    _
  $region19: #{link_prediction_fullbatch_forward.1} parent=0 // pred_check_branch
    %67 = sbr.rel (0) target = $region21
  $region20: #{link_prediction_fullbatch_forward.1} parent=0 // pred_region
    _
  $region21: #{link_prediction_fullbatch_forward.1} parent=0 // pred_fallthru
    _

</llo_original>
